<compile_context>
chip_gen: v7x
topology: tpu7x:2x2x1
jax: 0.10.0
libtpu: 0.0.40
codegen_flags: <defaults>
</compile_context>

<pallas_src>
import functools

import jax
import jax.numpy as jnp
from jax.experimental import pallas as pl
from jax.experimental.pallas import tpu as pltpu

_LANE = 128
_SUBLANE = 8
# Conservative per-kernel VMEM working-set budget: fits under the smallest default
# scoped limit (v5e: 16 MiB) and leaves pipelining headroom on v7x (64 MiB physical).
_VMEM_BUDGET = 12 * 1024 * 1024
_VMEM_LIMIT = 32 * 1024 * 1024


def _round_up(x, m):
    return ((x + m - 1) // m) * m


# ----------------------------------------------------------------------------- kernels
def _logreg_kernel_direct(x_ref, w_ref, b_ref, o_ref):
    """Whole-F path (single K step): one MXU pass, bias folded into the store."""
    o_ref[...] = (
        jnp.dot(x_ref[...], w_ref[...], preferred_element_type=jnp.float32)
        + b_ref[...]
    ).astype(o_ref.dtype)


def _logreg_kernel_ksplit(x_ref, w_ref, b_ref, o_ref, *, num_valid_k):
    """K-reduction path: the f32 output block is the accumulator.

    Initialized with the broadcast bias at k == 0; partial contributions are
    accumulated directly into o_ref (its block index is constant over k, so it
    stays VMEM-resident and is written back once per batch tile).
    """
    k = pl.program_id(1)

    @pl.when(k == 0)
    def _():
        o_ref[...] = jnp.broadcast_to(b_ref[...], o_ref.shape).astype(o_ref.dtype)

    x = x_ref[...]
    w = w_ref[...]
    if num_valid_k is not None:
        # The last K tile hangs past the real feature dim; zero the garbage tail of
        # BOTH operands so undefined values (possibly NaN/Inf) cannot leak into the sum.
        tk = x.shape[-1]
        col = k * tk + jax.lax.broadcasted_iota(jnp.int32, x.shape, dimension=1)
        x = jnp.where(col < num_valid_k, x, jnp.zeros_like(x))
        row = k * tk + jax.lax.broadcasted_iota(jnp.int32, w.shape, dimension=0)
        w = jnp.where(row < num_valid_k, w, jnp.zeros_like(w))

    o_ref[...] += jnp.dot(x, w, preferred_element_type=jnp.float32)


# ----------------------------------------------------------------------------- glue
def prepare_params(weight, bias, compute_dtype=jnp.bfloat16):
    """One-time prep (outside the hot path).

    torch-layout (C, F) weight, (C,) bias  ->  lane-dense (F, C_pad) compute_dtype
    weight and (1, C_pad) f32 bias, with classes zero-padded to a multiple of 128
    so output stores are full-width vst (never masked vst.msk).
    """
    C, F = weight.shape
    C_pad = _round_up(max(C, 1), _LANE)
    w_p = jnp.zeros((F, C_pad), dtype=compute_dtype).at[:, :C].set(
        weight.T.astype(compute_dtype)
    )
    b_p = jnp.zeros((1, C_pad), dtype=jnp.float32).at[0, :C].set(
        bias.astype(jnp.float32)
    )
    return w_p, b_p, C


def _pick_tiles(B, F, C_pad, in_bytes):
    """Pick (TB, TK) from a VMEM working-set budget."""
    # Batch tile: sublane-aligned, <= 512 rows; >= 2 tiles once B > 256 so the
    # 'parallel' batch axis actually feeds both v7x TensorCores.
    if B <= 256:
        TB = B                                   # block dim == full dim: always legal
    elif B <= 1024:
        TB = _round_up((B + 1) // 2, _SUBLANE)   # two roughly equal tiles
    else:
        TB = 512

    out_bytes = 4  # f32 output / accumulator

    def working_set(tk):
        # double-buffered x and w tiles + output tile (resident across K)
        return (2 * TB * tk * in_bytes
                + 2 * tk * C_pad * in_bytes
                + 2 * TB * C_pad * out_bytes)

    if working_set(F) <= _VMEM_BUDGET:
        return TB, F                 # whole-F: weight DMA'd exactly once, truly resident

    # K must be split. Prefer a lane-aligned tile dividing F (no tail masking),
    # otherwise the largest lane-aligned tile that fits (tail masked in-kernel).
    candidates = (4096, 2048, 1024, 512, 256, 128)
    for tk in candidates:
        if tk < F and F % tk == 0 and working_set(tk) <= _VMEM_BUDGET:
            return TB, tk
    for tk in candidates:
        if tk < F and working_set(tk) <= _VMEM_BUDGET:
            return TB, tk
    return TB, 128


@functools.partial(jax.jit, static_argnames=("num_classes",))
def logreg_forward(x, w_p, b_p, num_classes):
    """x: (B, F); w_p: (F, C_pad) from prepare_params; b_p: (1, C_pad) f32.

    Returns (B, num_classes) f32 logits == x @ W.T + b of the original nn.Linear.
    For peak bandwidth produce x in bf16 upstream; otherwise it is cast here.
    """
    B, F = x.shape
    F_w, C_pad = w_p.shape
    assert F_w == F, "weight feature dim mismatch"

    if x.dtype != w_p.dtype:
        x = x.astype(w_p.dtype)

    TB, TK = _pick_tiles(B, F, C_pad, jnp.dtype(w_p.dtype).itemsize)
    grid = (pl.cdiv(B, TB), pl.cdiv(F, TK))

    if grid[1] == 1:
        kernel = _logreg_kernel_direct
    else:
        mask_k = F if (F % TK) != 0 else None
        kernel = functools.partial(_logreg_kernel_ksplit, num_valid_k=mask_k)

    cost = pl.CostEstimate(
        flops=2 * B * F * C_pad,
        transcendentals=0,
        bytes_accessed=int(x.size) * x.dtype.itemsize
        + int(w_p.size) * w_p.dtype.itemsize
        + B * C_pad * 4,
    )

    out = pl.pallas_call(
        kernel,
        out_shape=jax.ShapeDtypeStruct((B, C_pad), jnp.float32),
        grid_spec=pltpu.PrefetchScalarGridSpec(
            num_scalar_prefetch=0,
            grid=grid,
            in_specs=[
                pl.BlockSpec((TB, TK), lambda i, k: (i, k)),     # x tile (streamed)
                pl.BlockSpec((TK, C_pad), lambda i, k: (k, 0)),  # weight (index const over i)
                pl.BlockSpec((1, C_pad), lambda i, k: (0, 0)),   # bias (const)
            ],
            out_specs=pl.BlockSpec((TB, C_pad), lambda i, k: (i, 0)),
        ),
        compiler_params=pltpu.CompilerParams(
            dimension_semantics=("parallel", "arbitrary"),
            vmem_limit_bytes=_VMEM_LIMIT,
        ),
        cost_estimate=cost,
    )(x, w_p, b_p)

    # Slice away class padding only (padded lanes hold zero-weight + zero-bias columns).
    return out[:, :num_classes]


# ----------------------------------------------------------------------------- demo
if __name__ == "__main__":
    batch, num_features, num_classes = 8, 32, 4

    key = jax.random.PRNGKey(0)
    kx, kw, kb = jax.random.split(key, 3)

    # Activations produced in bf16 upstream (recommended path); params in f32
    # (torch layout), prepared once.
    x = jax.random.normal(kx, (batch, num_features), dtype=jnp.float32).astype(jnp.bfloat16)
    bound = 1.0 / (num_features ** 0.5)
    weight = jax.random.uniform(kw, (num_classes, num_features),
                                minval=-bound, maxval=bound, dtype=jnp.float32)
    bias = jax.random.uniform(kb, (num_classes,),
                              minval=-bound, maxval=bound, dtype=jnp.float32)

    w_p, b_p, C = prepare_params(weight, bias)          # one-time, off the hot path

    out = logreg_forward(x, w_p, b_p, num_classes=C)
    out = jax.block_until_ready(out)

    # References: exact-precision (bf16 inputs, f32 accumulate) and loose f32.
    x_f32 = x.astype(jnp.float32)
    w_bf16_f32 = weight.astype(jnp.bfloat16).astype(jnp.float32)
    ref_matched = x_f32 @ w_bf16_f32.T + bias
    ref_f32 = x_f32 @ weight.T + bias

    assert out.shape == (batch, num_classes)
    assert out.dtype == jnp.float32
    assert jnp.allclose(out, ref_matched, atol=1e-4, rtol=1e-4), "mismatch vs matched-precision ref"
    assert jnp.allclose(out, ref_f32, atol=3e-2, rtol=3e-2), "mismatch vs f32 ref"

    print("KERNEL_OK")
</pallas_src>

<mosaic_0001>
module attributes {stable_mosaic.version = 11 : i64} {
  func.func @_logreg_kernel_direct(%arg0: i32, %arg1: i32, %arg2: memref<8x32xbf16, #tpu.memory_space<vmem>>, %arg3: memref<32x128xbf16, #tpu.memory_space<vmem>>, %arg4: memref<1x128xf32, #tpu.memory_space<vmem>>, %arg5: memref<8x128xf32, #tpu.memory_space<vmem>>) attributes {dimension_semantics = [#tpu.dimension_semantics<parallel>, #tpu.dimension_semantics<arbitrary>], iteration_bounds = array<i64: 1, 1>, scalar_prefetch = 0 : i64, scratch_operands = 0 : i64, tpu.core_type = #tpu.core_type<tc>, window_params = [{transform_indices = @transform_0, window_bounds = array<i64: 8, 32>}, {transform_indices = @transform_1, window_bounds = array<i64: 32, 128>}, {pipeline_mode = #tpu.pipeline_mode<synchronous>, transform_indices = @transform_2, window_bounds = array<i64: 1, 128>}, {transform_indices = @transform_3, window_bounds = array<i64: 8, 128>}]} {
    %c0 = arith.constant 0 : index
    %c0_0 = arith.constant 0 : index
    %0 = vector.load %arg2[%c0, %c0_0] : memref<8x32xbf16, #tpu.memory_space<vmem>>, vector<8x32xbf16>
    %c0_1 = arith.constant 0 : index
    %c0_2 = arith.constant 0 : index
    %1 = vector.load %arg3[%c0_1, %c0_2] : memref<32x128xbf16, #tpu.memory_space<vmem>>, vector<32x128xbf16>
    %cst = arith.constant dense<0.000000e+00> : vector<8x128xf32>
    %2 = tpu.matmul %0, %1, %cst {dimension_numbers = #tpu.dot_dimension_numbers<[1], [0], [0], [1], [0, 0, 1, 1], [], []>} : vector<8x32xbf16>, vector<32x128xbf16>, vector<8x128xf32> -> vector<8x128xf32>
    %c0_3 = arith.constant 0 : index
    %c0_4 = arith.constant 0 : index
    %3 = vector.load %arg4[%c0_3, %c0_4] : memref<1x128xf32, #tpu.memory_space<vmem>>, vector<1x128xf32>
    %4 = vector.broadcast %3 : vector<1x128xf32> to vector<8x128xf32>
    %5 = arith.addf %2, %4 : vector<8x128xf32>
    %c0_5 = arith.constant 0 : index
    %c0_6 = arith.constant 0 : index
    %6 = vector.load %arg5[%c0_5, %c0_6] : memref<8x128xf32, #tpu.memory_space<vmem>>, vector<8x128xf32>
    tpu.vector_store %arg5[%c0_5, %c0_6], %5 {strides = array<i32>} : memref<8x128xf32, #tpu.memory_space<vmem>>, vector<8x128xf32>,
    return
  }
  func.func @transform_0(%arg0: i32, %arg1: i32) -> (i32, i32) {
    %c0_i32 = arith.constant 0 : i32
    return %arg0, %arg1 : i32, i32
  }
  func.func @transform_1(%arg0: i32, %arg1: i32) -> (i32, i32) {
    %c0_i32 = arith.constant 0 : i32
    %c0_i32_0 = arith.constant 0 : i32
    return %arg1, %c0_i32 : i32, i32
  }
  func.func @transform_2(%arg0: i32, %arg1: i32) -> (i32, i32) {
    %c0_i32 = arith.constant 0 : i32
    %c0_i32_0 = arith.constant 0 : i32
    %c0_i32_1 = arith.constant 0 : i32
    return %c0_i32, %c0_i32_0 : i32, i32
  }
  func.func @transform_3(%arg0: i32, %arg1: i32) -> (i32, i32) {
    %c0_i32 = arith.constant 0 : i32
    %c0_i32_0 = arith.constant 0 : i32
    return %arg0, %c0_i32 : i32, i32
  }
}

</mosaic_0001>

<llo_original>
// kernel: logreg_forward.1
$region0: #{logreg_forward.1}
  #allocation0 [shape = 'u32[]', space=smem, size = 0x4, offset = 0x4, fixed_abs, tag = 'smem constant byte address 0x4 - core index']
  #allocation1 [shape = 'u32[144,128]{1,0:T(1,128)}', space=vmem, size = 0x12000, scoped, tag = 'internal scratch']
  %s0 = inlined_call_operand.hbm [shape: bf16[8,32], index: 0, kind: input, shape index: {}]
  %s1 = inlined_call_operand.hbm [shape: bf16[32,128], index: 1, kind: input, shape index: {}]
  %s2 = inlined_call_operand.vmem [shape: f32[1,128], index: 2, kind: input, shape index: {}]
  %s3 = inlined_call_operand.vmem [shape: f32[8,128], index: 3, kind: output, shape index: {}]
  %s4 = sld [smem:[#allocation0]]
  $region30: #{logreg_forward.1} parent=0
    _
  %s6 = ssub.s32 1, %s4
  %s7 = scalar_select 0, %s6, %s4
  $region1: #{logreg_forward.1} parent=0
    #allocation2 [shape = 'u8[2048]{0}', space=vmem, size = 0x800, scoped, tag = 'input window, operand 0, single buffered']
    #allocation3 [shape = 's32[1]{0}', space=sflag, size = 0x4, scoped, tag = 'scoped memory for logreg_forward.1']
    #allocation4 [shape = 'u8[8192]{0}', space=vmem, size = 0x2000, scoped, tag = 'input window, operand 1, single buffered']
    #allocation5 [shape = 's32[1]{0}', space=sflag, size = 0x4, scoped, tag = 'scoped memory for logreg_forward.1']
    %8 = vsyncpa [#allocation3], 0
    %9 = vsyncpa [#allocation5], 0
    // Predicated region
    $region2: #{logreg_forward.1} parent=1 // pred_check
      _
    $region3: #{logreg_forward.1} parent=1 // pred_check_branch
      %11 = sbr.rel (0) target = $region5
    $region4: #{logreg_forward.1} parent=1 // pred_region
      %s13 = ssub.s32 64, 64
      %14 = vsyncadd [#allocation3], %s13
      %s16 = sshll.u32 [#allocation2], 4
      %s17 = int_to_ptr.vmem [resolvable:$true] %s16
      %19 = dma.hbm_to_vmem [thread:$0]  %s0, 64, %s17, [#allocation3]
    $region5: #{logreg_forward.1} parent=1 // pred_fallthru
      _
    // Predicated region
    $region6: #{logreg_forward.1} parent=1 // pred_check
      _
    $region7: #{logreg_forward.1} parent=1 // pred_check_branch
      %21 = sbr.rel (0) target = $region9
    $region8: #{logreg_forward.1} parent=1 // pred_region
      %s23 = ssub.s32 256, 256
      %24 = vsyncadd [#allocation5], %s23
      %s25 = sshll.u32 [#allocation4], 4
      %s26 = int_to_ptr.vmem [resolvable:$true] %s25
      %31 = dma.hbm_to_vmem [thread:$0]  %s1, 256, %s26, [#allocation5], 64, 64, 4
    $region9: #{logreg_forward.1} parent=1 // pred_fallthru
      _
    // Predicated region
    $region10: #{logreg_forward.1} parent=1 // pred_check
      _
    $region11: #{logreg_forward.1} parent=1 // pred_check_branch
      %33 = sbr.rel (0) target = $region13
    $region12: #{logreg_forward.1} parent=1 // pred_region
      _
    $region13: #{logreg_forward.1} parent=1 // pred_fallthru
      _
    // Predicated region
    $region14: #{logreg_forward.1} parent=1 // pred_check
      _
    $region15: #{logreg_forward.1} parent=1 // pred_check_branch
      %35 = sbr.rel (0) target = $region17
    $region16: #{logreg_forward.1} parent=1 // pred_region
      %36 = dma.done [#allocation3], 64
    $region17: #{logreg_forward.1} parent=1 // pred_fallthru
      _
    // Predicated region
    $region18: #{logreg_forward.1} parent=1 // pred_check
      _
    $region19: #{logreg_forward.1} parent=1 // pred_check_branch
      %38 = sbr.rel (0) target = $region21
    $region20: #{logreg_forward.1} parent=1 // pred_region
      %39 = dma.done [#allocation5], 256
    $region21: #{logreg_forward.1} parent=1 // pred_fallthru
      _
    %v41 = vld [vmem:[#allocation2] sm:$0xf]
    %v42 = vld [vmem:[#allocation4] sm:$0xf]
    %v43 = vld [vmem:[#allocation4 + $0x4] sm:$0xf]
    %v44 = vld [vmem:[#allocation4 + $0x8] sm:$0xf]
    %v45 = vld [vmem:[#allocation4 + $0xc] sm:$0xf]
    %v46 = vld [vmem:[%s2] sm:$0x1]
    %v48 = vlaneseq
    %v49 = vshrl.u32 %v48, 7
    %v50 = vsub.s32 0, %v49
    %v51 = vrot.slane %v46, %v50
    %v57 = vunpack.c.l.b16 %v42
    %v58 = vunpack.c.l.b16 %v43
    %v59 = vunpack.c.l.b16 %v44
    %v60 = vunpack.c.l.b16 %v45
    %v61 = vpack.c.b16 %v58, %v57
    %v62 = vpack.c.b16 %v60, %v59
    %vm65 = vcmask 261120
    %v67 = vsel %vm65, %v41, 0
    %69 = vmatprep.subr.bf16.mxu0 0
    %70 = vmatpush1.bf16.msra.mxu0 %v61
    %71 = vmatprep.subr.bf16.mxu0 0
    %72 = vmatpush1.bf16.msra.mxu0 %v62
    %73 = vmatprep.subr.bf16.mxu0 0
    %74 = vmatpush1.bf16.msra.mxu0 0
    %75 = vmatprep.subr.bf16.mxu0 0
    %76 = vmatpush1.bf16.msra.mxu0 0
    %77 = vmatprep.subr.bf16.mxu0 0
    %78 = vmatpush1.bf16.msra.mxu0 0
    %79 = vmatprep.subr.bf16.mxu0 0
    %80 = vmatpush1.bf16.msra.mxu0 0
    %81 = vmatprep.subr.bf16.mxu0 0
    %82 = vmatpush1.bf16.msra.mxu0 0
    %83 = vmatprep.subr.bf16.mxu0 0
    %84 = vmatpush1.bf16.msra.mxu0 0
    %85 = vmatprep.subr.bf16.mxu0 0
    %86 = vmatpush1.bf16.msra.mxu0 0
    %87 = vmatprep.subr.bf16.mxu0 0
    %88 = vmatpush1.bf16.msra.mxu0 0
    %89 = vmatprep.subr.bf16.mxu0 0
    %90 = vmatpush1.bf16.msra.mxu0 0
    %91 = vmatprep.subr.bf16.mxu0 0
    %92 = vmatpush1.bf16.msra.mxu0 0
    %93 = vmatprep.subr.bf16.mxu0 0
    %94 = vmatpush1.bf16.msra.mxu0 0
    %95 = vmatprep.subr.bf16.mxu0 0
    %96 = vmatpush1.bf16.msra.mxu0 0
    %97 = vmatprep.subr.bf16.mxu0 0
    %98 = vmatpush1.bf16.msra.mxu0 0
    %99 = vmatprep.subr.bf16.mxu0 0
    %100 = vmatpush1.bf16.msra.mxu0 0
    %101 = vmatprep.mubr.bf16.mxu0 0
    %102 = vmatmul.mubr.bf16.gmra.mrb[0].mxu0 %v67
    %v103 = vpop.f32.mrb[0].mxu0
    %v104 = vadd.f32 %v51, %v103
    %v105 = vpop.f32.mrb[0].mxu0
    %v106 = vpop.f32.mrb[0].mxu0
    %v107 = vpop.f32.mrb[0].mxu0
    %108 = vdwg.mxu0
    %109 = vst [vmem:[%s3] sm:$0xff] %v104
    // Predicated region
    $region22: #{logreg_forward.1} parent=1 // pred_check
      _
    $region23: #{logreg_forward.1} parent=1 // pred_check_branch
      %111 = sbr.rel (0) target = $region25
    $region24: #{logreg_forward.1} parent=1 // pred_region
      _
    $region25: #{logreg_forward.1} parent=1 // pred_fallthru
      _
    // Predicated region
    $region26: #{logreg_forward.1} parent=1 // pred_check
      _
    $region27: #{logreg_forward.1} parent=1 // pred_check_branch
      %113 = sbr.rel (0) target = $region29
    $region28: #{logreg_forward.1} parent=1 // pred_region
      _
    $region29: #{logreg_forward.1} parent=1 // pred_fallthru
      _
    %114 = vsyncpa [#allocation3], 1
    %115 = vsyncpa [#allocation5], 1

</llo_original>
